<compile_context>
chip_gen: v7x
topology: tpu7x:2x2x1
jax: 0.10.0
libtpu: 0.0.40
codegen_flags: <defaults>
</compile_context>

<pallas_src>
import jax
import jax.numpy as jnp
import numpy as np
from jax.experimental import pallas as pl
from jax.experimental.pallas import tpu as pltpu

architecture_config = [
    (7, 16, 2, 3),                        # tuple branch
    "M",                                  # maxpool branch
    [(1, 8, 1, 0), (3, 32, 1, 1), 2],     # list (repeat) branch
    "M",
    (3, 1024, 2, 1),                      # final conv -> 1024 ch @ 1x1 (S = 1)
]

BN_EPS = 1e-5
LEAKY_SLOPE = 0.1


def _round_up(x, m):
    return ((x + m - 1) // m) * m


# ---------------------------------------------------------------------------
# Pallas kernels
# ---------------------------------------------------------------------------
def _gemm_affine_kernel(x_ref, w_ref, scale_ref, shift_ref, o_ref):
    """o = (x @ w) * scale + shift.  K is never gridded -> no accumulator."""
    acc = jnp.dot(x_ref[...].astype(jnp.bfloat16), w_ref[...],
                  preferred_element_type=jnp.float32)
    o_ref[...] = (acc * scale_ref[...] + shift_ref[...]).astype(o_ref.dtype)


def gemm_affine(x, w, scale2d, shift2d):
    """(x @ w) * scale + shift with per-output-column scale/shift.

    x: (M, K) f32, w: (K, N) bf16 (pre-reshaped at init),
    scale2d / shift2d: (1, N) f32.
    K and small N use full-extent blocks (allowed when block == dim), so no
    padding and no post-kernel slicing is needed.  The M axis is split in two
    when possible so both v7x TensorCores get a block; N streams in 512-wide
    tiles when large.
    """
    M, K = x.shape
    K2, N = w.shape
    assert K == K2 and scale2d.shape == (1, N) and shift2d.shape == (1, N)
    tm = M // 2 if (M % 16 == 0) else M          # multiple of 8, or == M
    tn = 512 if (N % 512 == 0) else N
    grid = (M // tm, N // tn)
    return pl.pallas_call(
        _gemm_affine_kernel,
        out_shape=jax.ShapeDtypeStruct((M, N), jnp.float32),
        grid_spec=pltpu.PrefetchScalarGridSpec(
            num_scalar_prefetch=0,
            grid=grid,
            in_specs=[
                pl.BlockSpec((tm, K), lambda i, j: (i, 0)),
                pl.BlockSpec((K, tn), lambda i, j: (0, j)),
                pl.BlockSpec((1, tn), lambda i, j: (0, j)),
                pl.BlockSpec((1, tn), lambda i, j: (0, j)),
            ],
            out_specs=pl.BlockSpec((tm, tn), lambda i, j: (i, j)),
        ),
        compiler_params=pltpu.CompilerParams(
            dimension_semantics=("parallel", "parallel")),
    )(x, w, scale2d, shift2d)


def _maxpool_kernel(x_ref, o_ref):
    # x_ref: (N*Ho, 2, Wo, 2, C) -> o_ref: (N*Ho, Wo, C)
    x = x_ref[...]
    m = jnp.maximum(x[:, 0], x[:, 1])     # max over the H pair (major dim)
    o_ref[...] = jnp.max(m, axis=2)       # max over the W pair (size-2 sublane dim)


def maxpool_2x2(x):
    """nn.MaxPool2d(kernel_size=(2,2), stride=2) on NHWC input, fully in-kernel."""
    n, h, w, c = x.shape
    assert h % 2 == 0 and w % 2 == 0
    ho, wo = h // 2, w // 2
    xr = x.reshape(n * ho, 2, wo, 2, c)   # free metadata reshape, one HBM read
    out = pl.pallas_call(
        _maxpool_kernel,
        out_shape=jax.ShapeDtypeStruct((n * ho, wo, c), x.dtype),
    )(xr)
    return out.reshape(n, ho, wo, c)


def _fc_head_kernel(x_ref, w1_ref, b1_ref, w2_ref, b2_ref, o_ref):
    """Fused Linear(1024,4096) + Dropout(0.0) + LeakyReLU(0.1) + Linear(4096,N2)."""
    j = pl.program_id(0)
    h = jnp.dot(x_ref[...].astype(jnp.bfloat16), w1_ref[...],
                preferred_element_type=jnp.float32)
    h = h + b1_ref[...]
    h = jnp.where(h >= 0.0, h, LEAKY_SLOPE * h)   # Dropout(0.0) is identity

    @pl.when(j == 0)
    def _init():
        o_ref[...] = jnp.broadcast_to(b2_ref[...], o_ref.shape)

    o_ref[...] += jnp.dot(h.astype(jnp.bfloat16), w2_ref[...],
                          preferred_element_type=jnp.float32)


def fc_head(x2d, params, fc_out):
    M, K1 = x2d.shape
    w1 = params["fc1_w"]
    b1 = params["fc1_b2d"]
    w2 = params["fc2_w_pad"]
    b2 = params["fc2_b_pad"]
    assert K1 == w1.shape[0]
    N1 = w1.shape[1]
    N2p = w2.shape[1]
    tn1 = 512 if N1 % 512 == 0 else N1
    grid = (N1 // tn1,)
    out = pl.pallas_call(
        _fc_head_kernel,
        out_shape=jax.ShapeDtypeStruct((M, N2p), jnp.float32),
        grid_spec=pltpu.PrefetchScalarGridSpec(
            num_scalar_prefetch=0,
            grid=grid,
            in_specs=[
                pl.BlockSpec((M, K1), lambda j: (0, 0)),     # resident activations
                pl.BlockSpec((K1, tn1), lambda j: (0, j)),   # stream fc1 weight tiles
                pl.BlockSpec((1, tn1), lambda j: (0, j)),
                pl.BlockSpec((tn1, N2p), lambda j: (j, 0)),  # matching fc2 weight rows
                pl.BlockSpec((1, N2p), lambda j: (0, 0)),
            ],
            out_specs=pl.BlockSpec((M, N2p), lambda j: (0, 0)),  # resident accumulator
        ),
        compiler_params=pltpu.CompilerParams(
            dimension_semantics=("arbitrary",)),
    )(x2d, w1, b1, w2, b2)
    return out[:, :fc_out]


# ---------------------------------------------------------------------------
# Glue (im2col, config parsing, params)
# ---------------------------------------------------------------------------
def im2col(x, k, stride, pad):
    """NHWC -> (N*Ho*Wo, k*k*C) patch matrix, (kh, kw, cin)-major columns."""
    # TODO(synk): convs are lowered via an explicit patch matrix (k^2 activation
    # blow-up) rather than an implicit-GEMM kernel; acceptable at these shapes
    # where the FC weights dominate HBM traffic.
    n, h, w, c = x.shape
    xp = jnp.pad(x, ((0, 0), (pad, pad), (pad, pad), (0, 0)))
    hp, wp = h + 2 * pad, w + 2 * pad
    ho = (hp - k) // stride + 1
    wo = (wp - k) // stride + 1
    cols = []
    for i in range(k):
        for j in range(k):
            cols.append(xp[:, i:i + stride * ho:stride,
                           j:j + stride * wo:stride, :])
    patches = jnp.stack(cols, axis=3)                  # (n, ho, wo, k*k, c)
    return patches.reshape(n * ho * wo, k * k * c), (n, ho, wo)


def parse_config(cfg, in_channels):
    layers = []
    c = in_channels
    for item in cfg:
        if isinstance(item, tuple):
            k, cout, s, p = item
            layers.append(("conv", c, cout, k, s, p))
            c = cout
        elif isinstance(item, str):
            layers.append(("pool",))
        elif isinstance(item, list):
            conv1, conv2, num_repeats = item
            for _ in range(num_repeats):
                layers.append(("conv", c, conv1[1], conv1[0], conv1[2], conv1[3]))
                layers.append(("conv", conv1[1], conv2[1], conv2[0], conv2[2], conv2[3]))
                c = conv2[1]
    return layers, c


def init_params(key, layers, S, B, C):
    """All weight-side preprocessing (reshape / pad / BN fold / bf16 cast) happens here."""
    params = {"darknet": []}
    for desc in layers:
        if desc[0] == "conv":
            _, cin, cout, k, _, _ = desc
            key, k1, k2, k3, k4, k5 = jax.random.split(key, 6)
            w = jax.random.normal(k1, (k, k, cin, cout), jnp.float32) / np.sqrt(k * k * cin)
            gamma = jax.random.uniform(k2, (cout,), jnp.float32, 0.8, 1.2)
            beta = 0.1 * jax.random.normal(k3, (cout,), jnp.float32)
            r_mean = 0.1 * jax.random.normal(k4, (cout,), jnp.float32)
            r_var = jax.random.uniform(k5, (cout,), jnp.float32, 0.5, 1.5)
            scale = gamma / jnp.sqrt(r_var + BN_EPS)
            shift = beta - r_mean * scale
            w_bf16 = w.astype(jnp.bfloat16)            # weights stored/streamed as bf16
            params["darknet"].append({
                "wmat": w_bf16.reshape(k * k * cin, cout),   # kernel GEMM weight
                "w_hwio": w_bf16.astype(jnp.float32),        # reference path (same values)
                "scale2d": scale.reshape(1, cout),
                "shift2d": shift.reshape(1, cout),
            })
        else:
            params["darknet"].append(None)

    fc_in = 1024 * S * S
    fc_out = S * S * (B * 5 + C)
    key, k1, k2, k3, k4 = jax.random.split(key, 5)
    w1 = jax.random.normal(k1, (fc_in, 4096), jnp.float32) / np.sqrt(fc_in)
    b1 = 0.01 * jax.random.normal(k2, (4096,), jnp.float32)
    w2 = jax.random.normal(k3, (4096, fc_out), jnp.float32) / np.sqrt(4096)
    b2 = 0.01 * jax.random.normal(k4, (fc_out,), jnp.float32)
    w1_bf16 = w1.astype(jnp.bfloat16)
    w2_bf16 = w2.astype(jnp.bfloat16)
    n2p = _round_up(fc_out, 128)                      # pad fc2 columns once, at init
    params["fc1_w"] = w1_bf16
    params["fc1_b2d"] = b1.reshape(1, 4096)
    params["fc2_w_pad"] = jnp.zeros((4096, n2p), jnp.bfloat16).at[:, :fc_out].set(w2_bf16)
    params["fc2_b_pad"] = jnp.zeros((1, n2p), jnp.float32).at[0, :fc_out].set(b2)
    # f32 copies of the (bf16-rounded) weights for the XLA reference path.
    params["fc1_w_ref"] = w1_bf16.astype(jnp.float32)
    params["fc1_b"] = b1
    params["fc2_w_ref"] = w2_bf16.astype(jnp.float32)
    params["fc2_b"] = b2
    return params


# ---------------------------------------------------------------------------
# Forward passes
# ---------------------------------------------------------------------------
def yolov1_forward(x_nchw, params, layers, fc_out):
    x = jnp.transpose(x_nchw, (0, 2, 3, 1)).astype(jnp.float32)   # NCHW -> NHWC
    for desc, p in zip(layers, params["darknet"]):
        if desc[0] == "conv":
            _, cin, cout, k, s, pad = desc
            cols, (n, ho, wo) = im2col(x, k, s, pad)
            # CNNBlock = conv (no bias) + BatchNorm; the leaky_relu result is
            # discarded in the reference (`x - self.leaky_relu(x)`), so no
            # activation here.
            y = gemm_affine(cols, p["wmat"], p["scale2d"], p["shift2d"])
            x = y.reshape(n, ho, wo, cout)
        else:
            x = maxpool_2x2(x)
    n = x.shape[0]
    # torch.flatten(x, start_dim=1) acts on NCHW ordering.
    x = jnp.transpose(x, (0, 3, 1, 2)).reshape(n, -1)
    # fc: Linear -> Dropout(0.0) (identity) -> LeakyReLU(0.1) -> Linear, fused.
    return fc_head(x, params, fc_out)


def reference_forward(x_nchw, params, layers):
    x = jnp.transpose(x_nchw, (0, 2, 3, 1)).astype(jnp.float32)
    for desc, p in zip(layers, params["darknet"]):
        if desc[0] == "conv":
            _, _, _, _, s, pad = desc
            y = jax.lax.conv_general_dilated(
                x, p["w_hwio"], (s, s), [(pad, pad), (pad, pad)],
                dimension_numbers=("NHWC", "HWIO", "NHWC"),
                precision=jax.lax.Precision.HIGHEST)
            x = y * p["scale2d"] + p["shift2d"]
        else:
            x = jax.lax.reduce_window(x, -jnp.inf, jax.lax.max,
                                      (1, 2, 2, 1), (1, 2, 2, 1), "VALID")
    n = x.shape[0]
    x = jnp.transpose(x, (0, 3, 1, 2)).reshape(n, -1)
    h = jnp.matmul(x, params["fc1_w_ref"],
                   precision=jax.lax.Precision.HIGHEST) + params["fc1_b"]
    h = jnp.where(h >= 0.0, h, LEAKY_SLOPE * h)
    out = jnp.matmul(h, params["fc2_w_ref"],
                     precision=jax.lax.Precision.HIGHEST) + params["fc2_b"]
    return out


if __name__ == "__main__":
    split_size, num_boxes, num_classes = 1, 2, 3
    in_channels = 3

    layers, out_c = parse_config(architecture_config, in_channels)
    assert out_c == 1024, "darknet must end with 1024 channels for the FC head"

    key = jax.random.PRNGKey(0)
    key_x, key_p = jax.random.split(key)
    x = jax.random.normal(key_x, (2, in_channels, 16, 16), jnp.float32)  # NCHW
    params = init_params(key_p, layers, split_size, num_boxes, num_classes)
    fc_out = split_size * split_size * (num_boxes * 5 + num_classes)

    out = yolov1_forward(x, params, layers, fc_out)
    out = jax.block_until_ready(out)

    expected_shape = (2, fc_out)
    assert out.shape == expected_shape, (out.shape, expected_shape)

    ref = jax.block_until_ready(reference_forward(x, params, layers))
    np.testing.assert_allclose(np.asarray(out), np.asarray(ref),
                               rtol=5e-2, atol=5e-2)

    print("KERNEL_OK")
</pallas_src>

<mosaic_0001>
module attributes {stable_mosaic.version = 11 : i64} {
  func.func @_gemm_affine_kernel(%arg0: i32, %arg1: i32, %arg2: memref<64x147xf32, #tpu.memory_space<vmem>>, %arg3: memref<147x16xbf16, #tpu.memory_space<vmem>>, %arg4: memref<1x16xf32, #tpu.memory_space<vmem>>, %arg5: memref<1x16xf32, #tpu.memory_space<vmem>>, %arg6: memref<64x16xf32, #tpu.memory_space<vmem>>) attributes {dimension_semantics = [#tpu.dimension_semantics<parallel>, #tpu.dimension_semantics<parallel>], iteration_bounds = array<i64: 2, 1>, scalar_prefetch = 0 : i64, scratch_operands = 0 : i64, tpu.core_type = #tpu.core_type<tc>, window_params = [{transform_indices = @transform_0, window_bounds = array<i64: 64, 147>}, {transform_indices = @transform_1, window_bounds = array<i64: 147, 16>}, {transform_indices = @transform_2, window_bounds = array<i64: 1, 16>}, {transform_indices = @transform_3, window_bounds = array<i64: 1, 16>}, {transform_indices = @transform_4, window_bounds = array<i64: 64, 16>}]} {
    %c0 = arith.constant 0 : index
    %c0_0 = arith.constant 0 : index
    %0 = vector.load %arg2[%c0, %c0_0] : memref<64x147xf32, #tpu.memory_space<vmem>>, vector<64x147xf32>
    %1 = arith.truncf %0 : vector<64x147xf32> to vector<64x147xbf16>
    %c0_1 = arith.constant 0 : index
    %c0_2 = arith.constant 0 : index
    %2 = vector.load %arg3[%c0_1, %c0_2] : memref<147x16xbf16, #tpu.memory_space<vmem>>, vector<147x16xbf16>
    %cst = arith.constant dense<0.000000e+00> : vector<64x16xf32>
    %3 = tpu.matmul %1, %2, %cst {dimension_numbers = #tpu.dot_dimension_numbers<[1], [0], [0], [1], [0, 0, 1, 1], [], []>} : vector<64x147xbf16>, vector<147x16xbf16>, vector<64x16xf32> -> vector<64x16xf32>
    %c0_3 = arith.constant 0 : index
    %c0_4 = arith.constant 0 : index
    %4 = vector.load %arg4[%c0_3, %c0_4] : memref<1x16xf32, #tpu.memory_space<vmem>>, vector<1x16xf32>
    %5 = vector.broadcast %4 : vector<1x16xf32> to vector<64x16xf32>
    %6 = arith.mulf %3, %5 : vector<64x16xf32>
    %c0_5 = arith.constant 0 : index
    %c0_6 = arith.constant 0 : index
    %7 = vector.load %arg5[%c0_5, %c0_6] : memref<1x16xf32, #tpu.memory_space<vmem>>, vector<1x16xf32>
    %8 = vector.broadcast %7 : vector<1x16xf32> to vector<64x16xf32>
    %9 = arith.addf %6, %8 : vector<64x16xf32>
    %c0_7 = arith.constant 0 : index
    %c0_8 = arith.constant 0 : index
    %10 = vector.load %arg6[%c0_7, %c0_8] : memref<64x16xf32, #tpu.memory_space<vmem>>, vector<64x16xf32>
    tpu.vector_store %arg6[%c0_7, %c0_8], %9 {strides = array<i32>} : memref<64x16xf32, #tpu.memory_space<vmem>>, vector<64x16xf32>,
    return
  }
  func.func @transform_0(%arg0: i32, %arg1: i32) -> (i32, i32) {
    %c0_i32 = arith.constant 0 : i32
    %c0_i32_0 = arith.constant 0 : i32
    return %arg0, %c0_i32 : i32, i32
  }
  func.func @transform_1(%arg0: i32, %arg1: i32) -> (i32, i32) {
    %c0_i32 = arith.constant 0 : i32
    %c0_i32_0 = arith.constant 0 : i32
    return %c0_i32, %arg1 : i32, i32
  }
  func.func @transform_2(%arg0: i32, %arg1: i32) -> (i32, i32) {
    %c0_i32 = arith.constant 0 : i32
    %c0_i32_0 = arith.constant 0 : i32
    return %c0_i32, %arg1 : i32, i32
  }
  func.func @transform_3(%arg0: i32, %arg1: i32) -> (i32, i32) {
    %c0_i32 = arith.constant 0 : i32
    %c0_i32_0 = arith.constant 0 : i32
    return %c0_i32, %arg1 : i32, i32
  }
  func.func @transform_4(%arg0: i32, %arg1: i32) -> (i32, i32) {
    %c0_i32 = arith.constant 0 : i32
    return %arg0, %arg1 : i32, i32
  }
}

</mosaic_0001>

<llo_original>
// kernel: tpu_custom_call.1
$region0: #{tpu_custom_call.1}
  #allocation0 [shape = 'u32[]', space=smem, size = 0x4, offset = 0x4, fixed_abs, tag = 'smem constant byte address 0x4 - core index']
  #allocation1 [shape = 'u32[144,128]{1,0:T(1,128)}', space=vmem, size = 0x12000, scoped, tag = 'internal scratch']
  %s0 = inlined_call_operand.vmem [shape: f32[128,147], index: 0, kind: input, shape index: {}]
  %s1 = inlined_call_operand.vmem [shape: bf16[147,16], index: 1, kind: input, shape index: {}]
  %s2 = inlined_call_operand.vmem [shape: f32[1,16], index: 2, kind: input, shape index: {}]
  %s3 = inlined_call_operand.vmem [shape: f32[1,16], index: 3, kind: input, shape index: {}]
  %s4 = inlined_call_operand.vmem [shape: f32[128,16], index: 4, kind: output, shape index: {}]
  %s5 = sld [smem:[#allocation0]]
  $region49: #{tpu_custom_call.1} parent=0
    _
  %s7 = ssub.s32 1, %s5
  %s8 = scalar_select 0, %s7, %s5
  loop: start=0, step=1, limit=4
  $region2: #{tpu_custom_call.1} parent=0 // loop_pre_header
    _
  $region3: #{tpu_custom_call.1} parent=0 // loop_header
    %s10 = sphi 0, %s14
    %p11 = scmp.ge.s32.totalorder %s10, 4
    %s17 = sphi 0, %s29
    %s18 = sphi 0, %s25
    %s19 = sphi 0, %s17
    %s20 = sphi 0, %s18
    %s21 = sphi 0, %s19
    %s22 = sphi 0, %s20
    %s32 = sphi 0, %s34
    %s35 = sphi 0, %s32
    %s36 = sphi 0, %s35
    %s52 = sphi 0, %s36
    %s58 = sphi 0, %s60
    %s61 = sphi 0, %s58
    %s62 = sphi 0, %s61
    %s78 = sphi 0, %s62
    %s84 = sphi 0, %s86
    %s87 = sphi 0, %s84
    %s88 = sphi 0, %s87
    %s104 = sphi 0, %s88
    %s110 = sphi 0, %s112
    %s113 = sphi 0, %s110
    %s114 = sphi 0, %s113
    %s130 = sphi 0, %s114
    %s138 = sphi 0, %s140
    %s141 = sphi 0, %s138
    %s142 = sphi 0, %s141
    %s158 = sphi 0, %s142
  $region4: #{tpu_custom_call.1} parent=0 // loop_header_branch
    %13 = sbr.rel (%p11) target = $region8
  $region5: #{tpu_custom_call.1} parent=0 // loop_body
    %s15 = ssub.s32 %s10, 1
    %s16 = ssub.s32 %s10, 2
    %s23 = sadd.s32 1, %s18
    %p24 = scmp.ge.s32.totalorder %s23, 1
    %s25 = scalar_select %p24, 0, %s23
    %s26 = sadd.s32 1, %s17
    %s27 = scalar_select %p24, %s26, %s17
    %p28 = scmp.ge.s32.totalorder %s27, 2
    %s29 = scalar_select %p28, 0, %s27
    %s30 = ssub.s32 %s17, %s29
    %p31 = scmp.eq.s32.totalorder %s30, 0
    %s33 = sadd.s32 %s32, 1
    %s34 = scalar_select %p31, %s32, %s33
    %p37 = pneg %p31
    %p38 = scmp.eq.s32.totalorder %s10, 1
    %p39 = por %p37, %p38
    %p40 = scmp.ne.s32.totalorder %s32, %s35
    %p41 = scmp.eq.s32.totalorder %s10, 0
    %p42 = por %p40, %p41
    %p43 = scmp.ne.s32.totalorder %s32, %s35
    %p44 = scmp.eq.s32.totalorder %s15, 1
    %p45 = por %p43, %p44
    %p46 = scmp.ne.s32.totalorder %s35, %s36
    %p47 = scmp.eq.s32.totalorder %s15, 0
    %p48 = por %p46, %p47
    %p49 = scmp.ne.s32.totalorder %s35, %s36
    %p50 = scmp.eq.s32.totalorder %s16, 1
    %p51 = por %p49, %p50
    %p53 = scmp.ne.s32.totalorder %s36, %s52
    %p54 = scmp.eq.s32.totalorder %s16, 0
    %p55 = por %p53, %p54
    %s56 = ssub.s32 %s18, %s25
    %p57 = scmp.eq.s32.totalorder %s56, 0
    %s59 = sadd.s32 %s58, 1
    %s60 = scalar_select %p57, %s58, %s59
    %p63 = pneg %p57
    %p64 = scmp.eq.s32.totalorder %s10, 1
    %p65 = por %p63, %p64
    %p66 = scmp.ne.s32.totalorder %s58, %s61
    %p67 = scmp.eq.s32.totalorder %s10, 0
    %p68 = por %p66, %p67
    %p69 = scmp.ne.s32.totalorder %s58, %s61
    %p70 = scmp.eq.s32.totalorder %s15, 1
    %p71 = por %p69, %p70
    %p72 = scmp.ne.s32.totalorder %s61, %s62
    %p73 = scmp.eq.s32.totalorder %s15, 0
    %p74 = por %p72, %p73
    %p75 = scmp.ne.s32.totalorder %s61, %s62
    %p76 = scmp.eq.s32.totalorder %s16, 1
    %p77 = por %p75, %p76
    %p79 = scmp.ne.s32.totalorder %s62, %s78
    %p80 = scmp.eq.s32.totalorder %s16, 0
    %p81 = por %p79, %p80
    %s82 = ssub.s32 %s18, %s25
    %p83 = scmp.eq.s32.totalorder %s82, 0
    %s85 = sadd.s32 %s84, 1
    %s86 = scalar_select %p83, %s84, %s85
    %p89 = pneg %p83
    %p90 = scmp.eq.s32.totalorder %s10, 1
    %p91 = por %p89, %p90
    %p92 = scmp.ne.s32.totalorder %s84, %s87
    %p93 = scmp.eq.s32.totalorder %s10, 0
    %p94 = por %p92, %p93
    %p95 = scmp.ne.s32.totalorder %s84, %s87
    %p96 = scmp.eq.s32.totalorder %s15, 1
    %p97 = por %p95, %p96
    %p98 = scmp.ne.s32.totalorder %s87, %s88
    %p99 = scmp.eq.s32.totalorder %s15, 0
    %p100 = por %p98, %p99
    %p101 = scmp.ne.s32.totalorder %s87, %s88
    %p102 = scmp.eq.s32.totalorder %s16, 1
    %p103 = por %p101, %p102
    %p105 = scmp.ne.s32.totalorder %s88, %s104
    %p106 = scmp.eq.s32.totalorder %s16, 0
    %p107 = por %p105, %p106
    %s108 = ssub.s32 %s18, %s25
    %p109 = scmp.eq.s32.totalorder %s108, 0
    %s111 = sadd.s32 %s110, 1
    %s112 = scalar_select %p109, %s110, %s111
    %p115 = pneg %p109
    %p116 = scmp.eq.s32.totalorder %s10, 1
    %p117 = por %p115, %p116
    %p118 = scmp.ne.s32.totalorder %s110, %s113
    %p119 = scmp.eq.s32.totalorder %s10, 0
    %p120 = por %p118, %p119
    %p121 = scmp.ne.s32.totalorder %s110, %s113
    %p122 = scmp.eq.s32.totalorder %s15, 1
    %p123 = por %p121, %p122
    %p124 = scmp.ne.s32.totalorder %s113, %s114
    %p125 = scmp.eq.s32.totalorder %s15, 0
    %p126 = por %p124, %p125
    %p127 = scmp.ne.s32.totalorder %s113, %s114
    %p128 = scmp.eq.s32.totalorder %s16, 1
    %p129 = por %p127, %p128
    %p131 = scmp.ne.s32.totalorder %s114, %s130
    %p132 = scmp.eq.s32.totalorder %s16, 0
    %p133 = por %p131, %p132
    %s134 = ssub.s32 %s17, %s29
    %s135 = ssub.s32 %s18, %s25
    %s136 = sor.u32 %s134, %s135
    %p137 = scmp.eq.s32.totalorder %s136, 0
    %s139 = sadd.s32 %s138, 1
    %s140 = scalar_select %p137, %s138, %s139
    %p143 = pneg %p137
    %p144 = scmp.eq.s32.totalorder %s10, 1
    %p145 = por %p143, %p144
    %p146 = scmp.ne.s32.totalorder %s138, %s141
    %p147 = scmp.eq.s32.totalorder %s10, 0
    %p148 = por %p146, %p147
    %p149 = scmp.ne.s32.totalorder %s138, %s141
    %p150 = scmp.eq.s32.totalorder %s15, 1
    %p151 = por %p149, %p150
    %p152 = scmp.ne.s32.totalorder %s141, %s142
    %p153 = scmp.eq.s32.totalorder %s15, 0
    %p154 = por %p152, %p153
    %p155 = scmp.ne.s32.totalorder %s141, %s142
    %p156 = scmp.eq.s32.totalorder %s16, 1
    %p157 = por %p155, %p156
    %p159 = scmp.ne.s32.totalorder %s142, %s158
    %p160 = scmp.eq.s32.totalorder %s16, 0
    %p161 = por %p159, %p160
    %p162 = scmp.le.s32.totalorder 1, %s10
    %p163 = scmp.lt.s32.totalorder %s10, 3
    %p164 = pnand %p162, %p163
    %p165 = pneg %p164
    // Predicated region
    $region9: #{tpu_custom_call.1} parent=5 // pred_check
      _
    $region10: #{tpu_custom_call.1} parent=5 // pred_check_branch
      %167 = sbr.rel (%p164) target = $region12
    $region11: #{tpu_custom_call.1} parent=5 // pred_region
      %s168 = ssub.s32 %s10, 1
      // Predicated region
      $region13: #{tpu_custom_call.1} parent=11 // pred_check
        %p169 = pneg %p74
      $region14: #{tpu_custom_call.1} parent=11 // pred_check_branch
        %171 = sbr.rel (%p169) target = $region16
      $region15: #{tpu_custom_call.1} parent=11 // pred_region
        %p172 = scmp.lt.s32.totalorder %s20, 0
        %s173 = scalar_select %p172, %s20, 0
        %s174 = smul.addr %s173, 4
        %s175 = scalar_lea.vmem %s1, %s174
      $region16: #{tpu_custom_call.1} parent=11 // pred_fallthru
        _
      // Predicated region
      $region17: #{tpu_custom_call.1} parent=11 // pred_check
        %p176 = pneg %p100
      $region18: #{tpu_custom_call.1} parent=11 // pred_check_branch
        %178 = sbr.rel (%p176) target = $region20
      $region19: #{tpu_custom_call.1} parent=11 // pred_region
        %p179 = scmp.lt.s32.totalorder %s20, 0
        %s180 = scalar_select %p179, %s20, 0
        %s181 = scalar_lea.vmem %s2, %s180
      $region20: #{tpu_custom_call.1} parent=11 // pred_fallthru
        _
      // Predicated region
      $region21: #{tpu_custom_call.1} parent=11 // pred_check
        %p182 = pneg %p126
      $region22: #{tpu_custom_call.1} parent=11 // pred_check_branch
        %184 = sbr.rel (%p182) target = $region24
      $region23: #{tpu_custom_call.1} parent=11 // pred_region
        %p185 = scmp.lt.s32.totalorder %s20, 0
        %s186 = scalar_select %p185, %s20, 0
        %s187 = scalar_lea.vmem %s3, %s186
      $region24: #{tpu_custom_call.1} parent=11 // pred_fallthru
        _
    $region12: #{tpu_custom_call.1} parent=5 // pred_fallthru
      _
    %p188 = scmp.lt.s32.totalorder %s10, 2
    // Predicated region
    $region25: #{tpu_custom_call.1} parent=5 // pred_check
      %p189 = pneg %p188
    $region26: #{tpu_custom_call.1} parent=5 // pred_check_branch
      %191 = sbr.rel (%p189) target = $region28
    $region27: #{tpu_custom_call.1} parent=5 // pred_region
      // Predicated region
      $region29: #{tpu_custom_call.1} parent=27 // pred_check
        %p192 = pneg %p42
      $region30: #{tpu_custom_call.1} parent=27 // pred_check_branch
        %194 = sbr.rel (%p192) target = $region32
      $region31: #{tpu_custom_call.1} parent=27 // pred_region
        %s195 = smul.u32 8, %s17
        %p196 = scmp.lt.s32.totalorder %s195, 15
        %s197 = scalar_select %p196, %s195, 15
        %s198 = smul.addr %s197, 2
        %s199 = smul.addr %s198, 8
        %s200 = scalar_lea.vmem %s0, %s199
        %s201 = smul.u32 8, %s17
      $region32: #{tpu_custom_call.1} parent=27 // pred_fallthru
        _
    $region28: #{tpu_custom_call.1} parent=5 // pred_fallthru
      _
    %p202 = scmp.le.s32.totalorder 1, %s10
    %p203 = scmp.lt.s32.totalorder %s10, 3
    %p204 = pnand %p202, %p203
    %p205 = pneg %p204
    // Predicated region
    $region33: #{tpu_custom_call.1} parent=5 // pred_check
      _
    $region34: #{tpu_custom_call.1} parent=5 // pred_check_branch
      %207 = sbr.rel (%p204) target = $region36
    $region35: #{tpu_custom_call.1} parent=5 // pred_region
      %s208 = ssub.s32 %s10, 1
      %s209 = smul.u32 8, %s19
      %p210 = scmp.lt.s32.totalorder %s209, 15
      %s211 = scalar_select %p210, %s209, 15
      %s212 = smul.addr %s211, 2
      %s213 = smul.addr %s212, 8
      %s214 = scalar_lea.vmem %s0, %s213
      %p215 = pneg %p48
      %p216 = pneg %p45
      %p217 = scmp.lt.s32.totalorder %s20, 0
      %s218 = scalar_select %p217, %s20, 0
      %s219 = smul.addr %s218, 4
      %s220 = scalar_lea.vmem %s1, %s219
      %p221 = pneg %p74
      %p222 = pneg %p71
      %p223 = scmp.lt.s32.totalorder %s20, 0
      %s224 = scalar_select %p223, %s20, 0
      %s225 = scalar_lea.vmem %s2, %s224
      %p226 = pneg %p100
      %p227 = pneg %p97
      %p228 = scmp.lt.s32.totalorder %s20, 0
      %s229 = scalar_select %p228, %s20, 0
      %s230 = scalar_lea.vmem %s3, %s229
      %p231 = pneg %p126
      %p232 = pneg %p123
      %p233 = pneg %p154
      %p234 = pneg %p151
      %s235 = smul.u32 8, %s19
      %p236 = scmp.lt.s32.totalorder %s235, 15
      %s237 = scalar_select %p236, %s235, 15
      %p238 = scmp.lt.s32.totalorder %s20, 0
      %s239 = scalar_select %p238, %s20, 0
      %s240 = sadd.s32 %s239, %s237
      %s241 = smul.addr %s240, 8
      %s242 = scalar_lea.vmem %s4, %s241
      %s243 = smul.u32 8, %s19
      %p244 = scmp.lt.s32.totalorder %s243, 15
      %s245 = scalar_select %p244, %s243, 15
      %s246 = smul.addr %s245, 2
      %s247 = smul.addr %s246, 8
      %s248 = scalar_lea.vmem %s0, %s247
      %s249 = smul.u32 8, %s19
      %p250 = scmp.lt.s32.totalorder %s20, 0
      %s251 = scalar_select %p250, %s20, 0
      %s252 = smul.addr %s251, 4
      %s253 = scalar_lea.vmem %s1, %s252
      %p254 = scmp.lt.s32.totalorder %s20, 0
      %s255 = scalar_select %p254, %s20, 0
      %s256 = scalar_lea.vmem %s2, %s255
      %p257 = scmp.lt.s32.totalorder %s20, 0
      %s258 = scalar_select %p257, %s20, 0
      %s259 = scalar_lea.vmem %s3, %s258
      %s260 = smul.u32 8, %s19
      %p261 = scmp.lt.s32.totalorder %s260, 15
      %s262 = scalar_select %p261, %s260, 15
      %p263 = scmp.lt.s32.totalorder %s20, 0
      %s264 = scalar_select %p263, %s20, 0
      %s265 = sadd.s32 %s264, %s262
      %s266 = smul.addr %s265, 8
      %s267 = scalar_lea.vmem %s4, %s266
      %s268 = smul.u32 8, %s19
      %v270 = vld [vmem:[%s248] sm:$0xff]
      %v271 = vld [vmem:[%s248 + $0x8] sm:$0xff]
      %v272 = vld [vmem:[%s248 + $0x10] sm:$0xff]
      %v273 = vld [vmem:[%s248 + $0x18] sm:$0xff]
      %v274 = vld [vmem:[%s248 + $0x20] sm:$0xff]
      %v275 = vld [vmem:[%s248 + $0x28] sm:$0xff]
      %v276 = vld [vmem:[%s248 + $0x30] sm:$0xff]
      %v277 = vld [vmem:[%s248 + $0x38] sm:$0xff]
      %v278 = vld [vmem:[%s248 + $0x40] sm:$0xff]
      %v279 = vld [vmem:[%s248 + $0x48] sm:$0xff]
      %v280 = vld [vmem:[%s248 + $0x50] sm:$0xff]
      %v281 = vld [vmem:[%s248 + $0x58] sm:$0xff]
      %v282 = vld [vmem:[%s248 + $0x60] sm:$0xff]
      %v283 = vld [vmem:[%s248 + $0x68] sm:$0xff]
      %v284 = vld [vmem:[%s248 + $0x70] sm:$0xff]
      %v285 = vld [vmem:[%s248 + $0x78] sm:$0xff]
      %v286 = vpack.c.bf16 %v272, %v270
      %v287 = vpack.c.bf16 %v273, %v271
      %v288 = vpack.c.bf16 %v276, %v274
      %v289 = vpack.c.bf16 %v277, %v275
      %v290 = vpack.c.bf16 %v280, %v278
      %v291 = vpack.c.bf16 %v281, %v279
      %v292 = vpack.c.bf16 %v284, %v282
      %v293 = vpack.c.bf16 %v285, %v283
      %v294 = vld [vmem:[%s253] sm:$0xf]
      %v295 = vld [vmem:[%s253 + $0x4] sm:$0xf]
      %v296 = vld [vmem:[%s253 + $0x8] sm:$0xf]
      %v297 = vld [vmem:[%s253 + $0xc] sm:$0xf]
      %v298 = vld [vmem:[%s253 + $0x10] sm:$0xf]
      %v299 = vld [vmem:[%s253 + $0x14] sm:$0xf]
      %v300 = vld [vmem:[%s253 + $0x18] sm:$0xf]
      %v301 = vld [vmem:[%s253 + $0x1c] sm:$0xf]
      %v302 = vld [vmem:[%s253 + $0x20] sm:$0xf]
      %v303 = vld [vmem:[%s253 + $0x24] sm:$0xf]
      %v304 = vld [vmem:[%s253 + $0x28] sm:$0xf]
      %v305 = vld [vmem:[%s253 + $0x2c] sm:$0xf]
      %v306 = vld [vmem:[%s253 + $0x30] sm:$0xf]
      %v307 = vld [vmem:[%s253 + $0x34] sm:$0xf]
      %v308 = vld [vmem:[%s253 + $0x38] sm:$0xf]
      %v309 = vld [vmem:[%s253 + $0x3c] sm:$0xf]
      %v310 = vld [vmem:[%s253 + $0x40] sm:$0xf]
      %v311 = vld [vmem:[%s253 + $0x44] sm:$0xf]
      %v312 = vld [vmem:[%s253 + $0x48] sm:$0x3]
      %v332 = vunpack.c.l.b16 %v294
      %v333 = vunpack.c.l.b16 %v295
      %v334 = vunpack.c.l.b16 %v296
      %v335 = vunpack.c.l.b16 %v297
      %v336 = vunpack.c.l.b16 %v298
      %v337 = vunpack.c.l.b16 %v299
      %v338 = vunpack.c.l.b16 %v300
      %v339 = vunpack.c.l.b16 %v301
      %v340 = vunpack.c.l.b16 %v302
      %v341 = vunpack.c.l.b16 %v303
      %v342 = vunpack.c.l.b16 %v304
      %v343 = vunpack.c.l.b16 %v305
      %v344 = vunpack.c.l.b16 %v306
      %v345 = vunpack.c.l.b16 %v307
      %v346 = vunpack.c.l.b16 %v308
      %v347 = vunpack.c.l.b16 %v309
      %v348 = vunpack.c.l.b16 %v310
      %v349 = vunpack.c.l.b16 %v311
      %v350 = vunpack.c.l.b16 %v312
      %v351 = vpack.c.b16 %v333, %v332
      %v352 = vpack.c.b16 %v335, %v334
      %v353 = vpack.c.b16 %v337, %v336
      %v354 = vpack.c.b16 %v339, %v338
      %v355 = vpack.c.b16 %v341, %v340
      %v356 = vpack.c.b16 %v343, %v342
      %v357 = vpack.c.b16 %v345, %v344
      %v358 = vpack.c.b16 %v347, %v346
      %v359 = vpack.c.b16 %v349, %v348
      %v360 = vpack.c.b16 %v350, %v350
      %vm370 = vcmask 154624
      %v372 = vsel %vm370, %v287, 0
      %v375 = vsel %vm370, %v289, 0
      %v378 = vsel %vm370, %v291, 0
      %v381 = vsel %vm370, %v293, 0
      %vm383 = vcmask 1040384
      %vm384 = vcmask 1041408
      %v385 = vsel %vm383, 4294967295, 65535
      %v386 = vsel %vm384, %v385, 0
      %v388 = vand.u32 %v360, %v386
      %390 = vmatprep.subr.bf16.mxu0 0
      %391 = vmatpush1.bf16.msra.mxu0 %v351
      %392 = vmatprep.subr.bf16.mxu0 0
      %393 = vmatpush1.bf16.msra.mxu0 %v352
      %394 = vmatprep.subr.bf16.mxu0 0
      %395 = vmatpush1.bf16.msra.mxu0 %v353
      %396 = vmatprep.subr.bf16.mxu0 0
      %397 = vmatpush1.bf16.msra.mxu0 %v354
      %398 = vmatprep.subr.bf16.mxu0 0
      %399 = vmatpush1.bf16.msra.mxu0 %v355
      %400 = vmatprep.subr.bf16.mxu0 0
      %401 = vmatpush1.bf16.msra.mxu0 %v356
      %402 = vmatprep.subr.bf16.mxu0 0
      %403 = vmatpush1.bf16.msra.mxu0 %v357
      %404 = vmatprep.subr.bf16.mxu0 0
      %405 = vmatpush1.bf16.msra.mxu0 %v358
      %406 = vmatprep.subr.bf16.mxu0 0
      %407 = vmatpush1.bf16.msra.mxu0 %v359
      %408 = vmatprep.subr.bf16.mxu0 0
      %409 = vmatpush1.bf16.msra.mxu0 %v388
      %410 = vmatprep.subr.bf16.mxu0 0
      %411 = vmatpush1.bf16.msra.mxu0 0
      %412 = vmatprep.subr.bf16.mxu0 0
      %413 = vmatpush1.bf16.msra.mxu0 0
      %414 = vmatprep.subr.bf16.mxu0 0
      %415 = vmatpush1.bf16.msra.mxu0 0
      %416 = vmatprep.subr.bf16.mxu0 0
      %417 = vmatpush1.bf16.msra.mxu0 0
      %418 = vmatprep.subr.bf16.mxu0 0
      %419 = vmatpush1.bf16.msra.mxu0 0
      %420 = vmatprep.subr.bf16.mxu0 0
      %421 = vmatpush1.bf16.msra.mxu0 0
      %422 = vmatprep.mubr.bf16.mxu0 %v372
      %423 = vmatmul.mubr.bf16.gmra.mrb[0].mxu0 %v286
      %v424 = vpop.f32.mrb[0].mxu0
      %v425 = vadd.f32 0.0, %v424
      %v426 = vpop.f32.mrb[0].mxu0
      %v427 = vpop.f32.mrb[0].mxu0
      %v428 = vadd.f32 0.0, %v427
      %v429 = vpop.f32.mrb[0].mxu0
      %430 = vmatprep.mubr.bf16.mxu0 %v375
      %431 = vmatmul.mubr.bf16.gmra.mrb[0].mxu0 %v288
      %v432 = vpop.f32.mrb[0].mxu0
      %v433 = vadd.f32 0.0, %v432
      %v434 = vpop.f32.mrb[0].mxu0
      %v435 = vpop.f32.mrb[0].mxu0
      %v436 = vadd.f32 0.0, %v435
      %v437 = vpop.f32.mrb[0].mxu0
      %438 = vmatprep.mubr.bf16.mxu0 %v378
      %439 = vmatmul.mubr.bf16.gmra.mrb[0].mxu0 %v290
      %v440 = vpop.f32.mrb[0].mxu0
      %v441 = vadd.f32 0.0, %v440
      %v442 = vpop.f32.mrb[0].mxu0
      %v443 = vpop.f32.mrb[0].mxu0
      %v444 = vadd.f32 0.0, %v443
      %v445 = vpop.f32.mrb[0].mxu0
      %446 = vmatprep.mubr.bf16.mxu0 %v381
      %447 = vmatmul.mubr.bf16.gmra.mrb[0].mxu0 %v292
      %v448 = vpop.f32.mrb[0].mxu0
      %v449 = vadd.f32 0.0, %v448
      %v450 = vpop.f32.mrb[0].mxu0
      %v451 = vpop.f32.mrb[0].mxu0
      %v452 = vadd.f32 0.0, %v451
      %v453 = vpop.f32.mrb[0].mxu0
      %454 = vdwg.mxu0
      %v455 = vld [vmem:[%s256] sm:$0x1]
      %v457 = vlaneseq
      %v458 = vshrl.u32 %v457, 7
      %v459 = vsub.s32 0, %v458
      %v460 = vrot.slane %v455, %v459
      %v462 = vmul.f32 %v425, %v460
      %v463 = vmul.f32 %v428, %v460
      %v464 = vmul.f32 %v433, %v460
      %v465 = vmul.f32 %v436, %v460
      %v466 = vmul.f32 %v441, %v460
      %v467 = vmul.f32 %v444, %v460
      %v468 = vmul.f32 %v449, %v460
      %v469 = vmul.f32 %v452, %v460
      %v470 = vld [vmem:[%s259] sm:$0x1]
      %v472 = vlaneseq
      %v473 = vshrl.u32 %v472, 7
      %v474 = vsub.s32 0, %v473
      %v475 = vrot.slane %v470, %v474
      %v477 = vadd.f32 %v462, %v475
      %v478 = vadd.f32 %v463, %v475
      %v479 = vadd.f32 %v464, %v475
      %v480 = vadd.f32 %v465, %v475
      %v481 = vadd.f32 %v466, %v475
      %v482 = vadd.f32 %v467, %v475
      %v483 = vadd.f32 %v468, %v475
      %v484 = vadd.f32 %v469, %v475
      %vm485 = vcmask 130048
      %486 = vst.msk [vmem:[%s267] sm:$0xff] %vm485, %v477
      %487 = vst.msk [vmem:[%s267 + $0x8] sm:$0xff] %vm485, %v478
      %488 = vst.msk [vmem:[%s267 + $0x10] sm:$0xff] %vm485, %v479
      %489 = vst.msk [vmem:[%s267 + $0x18] sm:$0xff] %vm485, %v480
      %490 = vst.msk [vmem:[%s267 + $0x20] sm:$0xff] %vm485, %v481
      %491 = vst.msk [vmem:[%s267 + $0x28] sm:$0xff] %vm485, %v482
      %492 = vst.msk [vmem:[%s267 + $0x30] sm:$0xff] %vm485, %v483
      %493 = vst.msk [vmem:[%s267 + $0x38] sm:$0xff] %vm485, %v484
      %s494 = smul.u32 8, %s19
      %p495 = scmp.lt.s32.totalorder %s494, 15
      %s496 = scalar_select %p495, %s494, 15
      %p497 = scmp.lt.s32.totalorder %s20, 0
      %s498 = scalar_select %p497, %s20, 0
      %s499 = sadd.s32 %s498, %s496
      %s500 = smul.addr %s499, 8
      %s501 = scalar_lea.vmem %s4, %s500
      // Predicated region
      $region37: #{tpu_custom_call.1} parent=35 // pred_check
        %p502 = pneg %p151
      $region38: #{tpu_custom_call.1} parent=35 // pred_check_branch
        %504 = sbr.rel (%p502) target = $region40
      $region39: #{tpu_custom_call.1} parent=35 // pred_region
        %s505 = smul.u32 8, %s19
      $region40: #{tpu_custom_call.1} parent=35 // pred_fallthru
        _
    $region36: #{tpu_custom_call.1} parent=5 // pred_fallthru
      _
    %p506 = scmp.le.s32.totalorder 2, %s10
    // Predicated region
    $region41: #{tpu_custom_call.1} parent=5 // pred_check
      %p507 = pneg %p506
    $region42: #{tpu_custom_call.1} parent=5 // pred_check_branch
      %509 = sbr.rel (%p507) target = $region44
    $region43: #{tpu_custom_call.1} parent=5 // pred_region
      %s510 = ssub.s32 %s10, 2
      // Predicated region
      $region45: #{tpu_custom_call.1} parent=43 // pred_check
        %p511 = pneg %p157
      $region46: #{tpu_custom_call.1} parent=43 // pred_check_branch
        %513 = sbr.rel (%p511) target = $region48
      $region47: #{tpu_custom_call.1} parent=43 // pred_region
        %s514 = smul.u32 8, %s21
        %p515 = scmp.lt.s32.totalorder %s514, 15
        %s516 = scalar_select %p515, %s514, 15
        %p517 = scmp.lt.s32.totalorder %s22, 0
        %s518 = scalar_select %p517, %s22, 0
        %s519 = sadd.s32 %s518, %s516
        %s520 = smul.addr %s519, 8
        %s521 = scalar_lea.vmem %s4, %s520
      $region48: #{tpu_custom_call.1} parent=43 // pred_fallthru
        _
    $region44: #{tpu_custom_call.1} parent=5 // pred_fallthru
      _
  $region6: #{tpu_custom_call.1} parent=0 // loop_footer
    %s14 = sadd.s32 1, %s10
  $region7: #{tpu_custom_call.1} parent=0 // loop_footer_branch
    %9 = sbr.rel target = $region3
  $region8: #{tpu_custom_call.1} parent=0 // loop_exit
    _

</llo_original>
